<compile_context>
chip_gen: v7x
topology: tpu7x:2x2x1
jax: 0.10.0
libtpu: 0.0.40
codegen_flags: <defaults>
</compile_context>

<pallas_src>
import functools

import jax
import jax.numpy as jnp
from jax.experimental import pallas as pl
from jax.experimental.pallas import tpu as pltpu

_VMEM_LIMIT = 48 * 1024 * 1024


def _round_up(x, m):
    return (x + m - 1) // m * m


def _pick_tile(padded_dim, target, align):
    """Largest multiple-of-`align` divisor of `padded_dim` that is <= target."""
    t = min(int(target), int(padded_dim))
    t -= t % align
    t = max(t, align)
    while padded_dim % t:
        t -= align
    return t


# ---------------------------------------------------------------------------
# Pass 1 (fused): per-row abs-max -> symmetric fake-quant -> cast -> transpose.
#   input  : W  (Np, Kp)  (original orientation, hardware-minimum padded)
#   output : Wq^T (Kp, Np) in the MXU feed dtype.
# ---------------------------------------------------------------------------
def _prep_weight_kernel(w_ref, o_ref, *, qmin, qmax, quantize):
    w = w_ref[...].astype(jnp.float32)                       # (tn1, Kp)
    if quantize:
        amax = jnp.max(jnp.abs(w), axis=1, keepdims=True)    # (tn1, 1), per output channel
        amax = jnp.where(amax == 0.0, jnp.ones_like(amax), amax)
        scale = amax / qmax                                  # scale stays f32
        w = jnp.clip(jnp.round(w / scale), qmin, qmax) * scale
    o_ref[...] = w.T.astype(o_ref.dtype)                     # (Kp, tn1)


def _prepare_weight(w_padded, *, bit_width, out_dtype):
    Np, Kp = w_padded.shape
    quantize = bit_width is not None
    qmin = qmax = 0.0
    if quantize:
        qmin = float(-(2 ** (bit_width - 1)))
        qmax = float(2 ** (bit_width - 1) - 1)

    # Pass-1 is pure HBM bandwidth: make the row-tile as large as a ~28 MiB budget allows
    # (input + transposed output, double buffered), but a divisor of Np.
    in_bytes = w_padded.dtype.itemsize
    out_bytes = jnp.dtype(out_dtype).itemsize
    budget = 28 * 1024 * 1024
    tn1_cap = max(128, budget // (2 * Kp * (in_bytes + out_bytes)))
    tn1 = _pick_tile(Np, min(1024, tn1_cap), 128)

    kernel = functools.partial(_prep_weight_kernel, qmin=qmin, qmax=qmax, quantize=quantize)
    return pl.pallas_call(
        kernel,
        out_shape=jax.ShapeDtypeStruct((Kp, Np), out_dtype),
        grid=(Np // tn1,),
        in_specs=[pl.BlockSpec((tn1, Kp), lambda j: (j, 0))],
        out_specs=pl.BlockSpec((Kp, tn1), lambda j: (0, j)),
        compiler_params=pltpu.CompilerParams(
            dimension_semantics=("parallel",),
            vmem_limit_bytes=_VMEM_LIMIT),
    )(w_padded)


# ---------------------------------------------------------------------------
# Pass 2: tiled matmul  out = x @ Wq^T + b  with f32 accumulation.
# ---------------------------------------------------------------------------
def _linear_kernel(x_ref, w_ref, b_ref, o_ref, acc_ref, *, mxu_dtype):
    k = pl.program_id(2)

    @pl.when(k == 0)
    def _():
        acc_ref[...] = jnp.zeros_like(acc_ref)

    # Canonical (tm,tk) @ (tk,tn): weight already transposed/cast by pass 1.
    acc_ref[...] += jnp.dot(
        x_ref[...].astype(mxu_dtype), w_ref[...],
        preferred_element_type=jnp.float32)

    @pl.when(k == pl.num_programs(2) - 1)
    def _():
        o_ref[...] = (acc_ref[...] + b_ref[...].astype(jnp.float32)).astype(o_ref.dtype)


def quantized_linear(x, weight, bias=None, bit_width=None, *,
                     mxu_dtype=jnp.bfloat16,
                     target_tm=512, target_tn=512, target_tk=1024):
    """F.linear(x, fake_quant(weight), fake_quant(bias)) with symmetric min-max quantization."""
    lead = x.shape[:-1]
    K = x.shape[-1]
    N, Kw = weight.shape
    assert Kw == K
    x2 = x.reshape(-1, K)
    M = x2.shape[0]

    # ---- hardware-minimum padding only (M -> x8, N/K -> x128) ----
    Mp, Np, Kp = _round_up(M, 8), _round_up(N, 128), _round_up(K, 128)
    xp = x2 if (Mp, Kp) == (M, K) else jnp.pad(x2, ((0, Mp - M), (0, Kp - K)))
    wp = weight if (Np, Kp) == (N, K) else jnp.pad(weight, ((0, Np - N), (0, Kp - K)))

    # ---- pass 1: fused abs-max + fake-quant + cast + transpose (weight read once) ----
    wT = _prepare_weight(wp, bit_width=bit_width, out_dtype=mxu_dtype)

    # ---- bias fake-quant: per-tensor, O(N) parameter setup, plain JAX ----
    b = jnp.zeros((N,), dtype=jnp.float32) if bias is None else bias.astype(jnp.float32)
    if bit_width is not None and bias is not None:
        qmin = float(-(2 ** (bit_width - 1)))
        qmax = float(2 ** (bit_width - 1) - 1)
        bmax = jnp.max(jnp.abs(b))
        bmax = jnp.where(bmax == 0, jnp.ones_like(bmax), bmax)
        bs = bmax / qmax
        b = jnp.clip(jnp.round(b / bs), qmin, qmax) * bs
    bp = (b if Np == N else jnp.pad(b, (0, Np - N))).reshape(1, Np)

    # ---- tile selection: divisors of the padded dims, capped at the targets ----
    tm = _pick_tile(Mp, target_tm, 8)
    tn = _pick_tile(Np, target_tn, 128)
    tk = _pick_tile(Kp, target_tk, 128)
    # v7x megacore: guarantee >= 2 blocks along at least one "parallel" axis when possible.
    if Mp // tm == 1 and Np // tn == 1:
        if Mp >= 16:
            tm = _pick_tile(Mp, max(8, Mp // 2), 8)
        elif Np >= 256:
            tn = _pick_tile(Np, max(128, Np // 2), 128)

    grid = (Mp // tm, Np // tn, Kp // tk)
    kernel = functools.partial(_linear_kernel, mxu_dtype=mxu_dtype)
    out = pl.pallas_call(
        kernel,
        out_shape=jax.ShapeDtypeStruct((Mp, Np), x.dtype),
        grid_spec=pltpu.PrefetchScalarGridSpec(
            num_scalar_prefetch=0,
            grid=grid,
            in_specs=[
                pl.BlockSpec((tm, tk), lambda i, j, k: (i, k)),   # x tile (f32, cast in-kernel)
                pl.BlockSpec((tk, tn), lambda i, j, k: (k, j)),   # Wq^T tile (mxu_dtype)
                pl.BlockSpec((1, tn), lambda i, j, k: (0, j)),    # bias tile
            ],
            out_specs=pl.BlockSpec((tm, tn), lambda i, j, k: (i, j)),
            scratch_shapes=[pltpu.VMEM((tm, tn), jnp.float32)],
        ),
        compiler_params=pltpu.CompilerParams(
            dimension_semantics=("parallel", "parallel", "arbitrary"),
            vmem_limit_bytes=_VMEM_LIMIT),
    )(xp, wT, bp)

    out = out[:M, :N] if (Mp, Np) != (M, N) else out
    return out.reshape(*lead, N)


# ---------------------------------------------------------------------------
# Pure-JAX reference mirroring the PyTorch module (optionally with bf16 MXU feed).
# ---------------------------------------------------------------------------
def _reference(x, weight, bias, bit_width, mxu_dtype=jnp.float32):
    if bit_width is None:
        wq, bq = weight, (0.0 if bias is None else bias)
    else:
        qmin = -(2 ** (bit_width - 1))
        qmax = 2 ** (bit_width - 1) - 1
        wmax = jnp.max(jnp.abs(weight), axis=1, keepdims=True)
        wmax = jnp.where(wmax == 0, jnp.ones_like(wmax), wmax)
        ws = wmax / qmax
        wq = jnp.clip(jnp.round(weight / ws), qmin, qmax) * ws
        if bias is None:
            bq = 0.0
        else:
            bmax = jnp.max(jnp.abs(bias))
            bmax = jnp.where(bmax == 0, jnp.ones_like(bmax), bmax)
            bs = bmax / qmax
            bq = jnp.clip(jnp.round(bias / bs), qmin, qmax) * bs
    out = jnp.einsum("...k,nk->...n",
                     x.astype(mxu_dtype).astype(jnp.float32),
                     wq.astype(mxu_dtype).astype(jnp.float32),
                     precision=jax.lax.Precision.HIGHEST)
    return out + bq


if __name__ == "__main__":
    # Small shapes consistent with the module's forward: [batch, seq, in_features].
    batch, seq, in_features, out_features = 2, 8, 32, 32
    key = jax.random.PRNGKey(0)
    kx, kw, kb = jax.random.split(key, 3)
    x = jax.random.normal(kx, (batch, seq, in_features), dtype=jnp.float32)
    weight = jax.random.normal(kw, (out_features, in_features), dtype=jnp.float32) * 0.1
    bias = jax.random.normal(kb, (out_features,), dtype=jnp.float32) * 0.1

    # Exact-semantics check (f32 MXU path).
    out = jax.block_until_ready(
        quantized_linear(x, weight, bias, bit_width=8, mxu_dtype=jnp.float32))
    ref = _reference(x, weight, bias, 8)
    assert out.shape == (batch, seq, out_features)
    assert jnp.allclose(out, ref, atol=1e-4, rtol=1e-4), float(jnp.max(jnp.abs(out - ref)))

    # No-quantization path (bit_width=None): quant math skipped entirely.
    out_fp = jax.block_until_ready(
        quantized_linear(x, weight, bias, bit_width=None, mxu_dtype=jnp.float32))
    ref_fp = _reference(x, weight, bias, None)
    assert jnp.allclose(out_fp, ref_fp, atol=1e-4, rtol=1e-4)

    # Unaligned shape exercising the hardware-minimum padding path (M->8, N/K->128).
    b1, s1, k1d, n1d = 2, 5, 100, 76
    ka, kbw, kbb = jax.random.split(jax.random.PRNGKey(2), 3)
    x_u = jax.random.normal(ka, (b1, s1, k1d), dtype=jnp.float32)
    w_u = jax.random.normal(kbw, (n1d, k1d), dtype=jnp.float32) * 0.1
    b_u = jax.random.normal(kbb, (n1d,), dtype=jnp.float32) * 0.1
    out_u = jax.block_until_ready(
        quantized_linear(x_u, w_u, b_u, bit_width=8, mxu_dtype=jnp.float32))
    ref_u = _reference(x_u, w_u, b_u, 8)
    assert out_u.shape == (b1, s1, n1d)
    assert jnp.allclose(out_u, ref_u, atol=1e-4, rtol=1e-4), \
        float(jnp.max(jnp.abs(out_u - ref_u)))

    # Multi-tile grid, no over-padding (N=384, K=640 stay exact), default bf16 MXU feed.
    b2, s2, k2, n2 = 2, 64, 640, 384
    k0, k1, k2r = jax.random.split(jax.random.PRNGKey(1), 3)
    x_big = jax.random.normal(k0, (b2, s2, k2), dtype=jnp.float32)
    w_big = jax.random.normal(k1, (n2, k2), dtype=jnp.float32) * 0.05
    b_big = jax.random.normal(k2r, (n2,), dtype=jnp.float32) * 0.05
    out_big = jax.block_until_ready(quantized_linear(x_big, w_big, b_big, bit_width=8))
    ref_big = _reference(x_big, w_big, b_big, 8, mxu_dtype=jnp.bfloat16)
    assert out_big.shape == (b2, s2, n2)
    assert jnp.allclose(out_big, ref_big, atol=2e-2, rtol=2e-2), \
        float(jnp.max(jnp.abs(out_big - ref_big)))

    print("KERNEL_OK")
</pallas_src>

<mosaic_0001>
module attributes {stable_mosaic.version = 11 : i64} {
  func.func @_prep_weight_kernel(%arg0: i32, %arg1: memref<128x128xf32, #tpu.memory_space<vmem>>, %arg2: memref<128x128xf32, #tpu.memory_space<vmem>>) attributes {dimension_semantics = [#tpu.dimension_semantics<parallel>], iteration_bounds = array<i64: 1>, scalar_prefetch = 0 : i64, scratch_operands = 0 : i64, tpu.core_type = #tpu.core_type<tc>, window_params = [{transform_indices = @transform_0, window_bounds = array<i64: 128, 128>}, {transform_indices = @transform_1, window_bounds = array<i64: 128, 128>}]} {
    %c0 = arith.constant 0 : index
    %c0_0 = arith.constant 0 : index
    %0 = vector.load %arg1[%c0, %c0_0] : memref<128x128xf32, #tpu.memory_space<vmem>>, vector<128x128xf32>
    %1 = math.absf %0 : vector<128x128xf32>
    %cst = arith.constant dense<0xFF800000> : vector<128xf32>
    %2 = vector.multi_reduction <maximumf>, %1, %cst [1] : vector<128x128xf32> to vector<128xf32>
    %3 = vector.shape_cast %2 : vector<128xf32> to vector<128x1xf32>
    %cst_1 = arith.constant 0.000000e+00 : f32
    %4 = vector.broadcast %cst_1 : f32 to vector<128x1xf32>
    %5 = arith.cmpf oeq, %3, %4 : vector<128x1xf32>
    %cst_2 = arith.constant 1.000000e+00 : f32
    %6 = vector.broadcast %cst_2 : f32 to vector<128x1xf32>
    %7 = arith.select %5, %6, %3 : vector<128x1xi1>, vector<128x1xf32>
    %cst_3 = arith.constant 1.270000e+02 : f32
    %8 = vector.broadcast %cst_3 : f32 to vector<128x1xf32>
    %9 = arith.divf %7, %8 : vector<128x1xf32>
    %10 = vector.broadcast %9 : vector<128x1xf32> to vector<128x128xf32>
    %11 = arith.divf %0, %10 : vector<128x128xf32>
    %12 = math.roundeven %11 : vector<128x128xf32>
    %cst_4 = arith.constant -1.280000e+02 : f32
    %cst_5 = arith.constant 1.270000e+02 : f32
    %13 = vector.broadcast %cst_4 : f32 to vector<128x128xf32>
    %14 = arith.maximumf %13, %12 : vector<128x128xf32>
    %15 = vector.broadcast %cst_5 : f32 to vector<128x128xf32>
    %16 = arith.minimumf %15, %14 : vector<128x128xf32>
    %17 = vector.broadcast %9 : vector<128x1xf32> to vector<128x128xf32>
    %18 = arith.mulf %16, %17 : vector<128x128xf32>
    %19 = tpu.transpose %18, [1, 0] : vector<128x128xf32> -> vector<128x128xf32>
    %c0_6 = arith.constant 0 : index
    %c0_7 = arith.constant 0 : index
    %20 = vector.load %arg2[%c0_6, %c0_7] : memref<128x128xf32, #tpu.memory_space<vmem>>, vector<128x128xf32>
    tpu.vector_store %arg2[%c0_6, %c0_7], %19 {strides = array<i32>} : memref<128x128xf32, #tpu.memory_space<vmem>>, vector<128x128xf32>,
    return
  }
  func.func @transform_0(%arg0: i32) -> (i32, i32) {
    %c0_i32 = arith.constant 0 : i32
    %c0_i32_0 = arith.constant 0 : i32
    return %arg0, %c0_i32 : i32, i32
  }
  func.func @transform_1(%arg0: i32) -> (i32, i32) {
    %c0_i32 = arith.constant 0 : i32
    %c0_i32_0 = arith.constant 0 : i32
    return %c0_i32, %arg0 : i32, i32
  }
}

</mosaic_0001>

<llo_original>
// kernel: tpu_custom_call.1
$region0: #{tpu_custom_call.1}
  #allocation0 [shape = 'u32[]', space=smem, size = 0x4, offset = 0x4, fixed_abs, tag = 'smem constant byte address 0x4 - core index']
  #allocation1 [shape = 'u32[144,128]{1,0:T(1,128)}', space=vmem, size = 0x12000, scoped, tag = 'internal scratch']
  %s0 = inlined_call_operand.hbm [shape: f32[128,128], index: 0, kind: input, shape index: {}]
  %s1 = inlined_call_operand.hbm [shape: f32[128,128], index: 1, kind: output, shape index: {}]
  %s2 = sld [smem:[#allocation0]]
  $region18: #{tpu_custom_call.1} parent=0
    _
  %s4 = ssub.s32 1, %s2
  %s5 = scalar_select 0, %s4, %s2
  $region1: #{tpu_custom_call.1} parent=0
    #allocation2 [shape = 'u8[65536]{0}', space=vmem, size = 0x10000, scoped, tag = 'input window, operand 0, single buffered']
    #allocation3 [shape = 's32[1]{0}', space=sflag, size = 0x4, scoped, tag = 'scoped memory for tpu_custom_call.1']
    #allocation4 [shape = 's32[1]{0}', space=sflag, size = 0x4, scoped, tag = 'scoped memory for tpu_custom_call.1']
    #allocation5 [shape = 'u8[65536]{0}', space=vmem, size = 0x10000, scoped, tag = 'output window, operand 0, single buffered']
    %6 = vsyncpa [#allocation3], 0
    %7 = vsyncpa [#allocation4], 0
    // Predicated region
    $region2: #{tpu_custom_call.1} parent=1 // pred_check
      _
    $region3: #{tpu_custom_call.1} parent=1 // pred_check_branch
      %9 = sbr.rel (0) target = $region5
    $region4: #{tpu_custom_call.1} parent=1 // pred_region
      %s11 = ssub.s32 2048, 2048
      %12 = vsyncadd [#allocation3], %s11
      %s13 = sshll.u32 [#allocation2], 4
      %s14 = int_to_ptr.vmem [resolvable:$true] %s13
      %19 = dma.hbm_to_vmem [thread:$0]  %s0, 2048, %s14, [#allocation3], 128, 128, 8
    $region5: #{tpu_custom_call.1} parent=1 // pred_fallthru
      _
    // Predicated region
    $region6: #{tpu_custom_call.1} parent=1 // pred_check
      _
    $region7: #{tpu_custom_call.1} parent=1 // pred_check_branch
      %21 = sbr.rel (0) target = $region9
    $region8: #{tpu_custom_call.1} parent=1 // pred_region
      %22 = dma.done [#allocation3], 2048
    $region9: #{tpu_custom_call.1} parent=1 // pred_fallthru
      _
    %v23 = vld [vmem:[#allocation2] sm:$0xff]
    %v24 = vld [vmem:[#allocation2 + $0x8] sm:$0xff]
    %v25 = vld [vmem:[#allocation2 + $0x10] sm:$0xff]
    %v26 = vld [vmem:[#allocation2 + $0x18] sm:$0xff]
    %v27 = vld [vmem:[#allocation2 + $0x20] sm:$0xff]
    %v28 = vld [vmem:[#allocation2 + $0x28] sm:$0xff]
    %v29 = vld [vmem:[#allocation2 + $0x30] sm:$0xff]
    %v30 = vld [vmem:[#allocation2 + $0x38] sm:$0xff]
    %v31 = vld [vmem:[#allocation2 + $0x40] sm:$0xff]
    %v32 = vld [vmem:[#allocation2 + $0x48] sm:$0xff]
    %v33 = vld [vmem:[#allocation2 + $0x50] sm:$0xff]
    %v34 = vld [vmem:[#allocation2 + $0x58] sm:$0xff]
    %v35 = vld [vmem:[#allocation2 + $0x60] sm:$0xff]
    %v36 = vld [vmem:[#allocation2 + $0x68] sm:$0xff]
    %v37 = vld [vmem:[#allocation2 + $0x70] sm:$0xff]
    %v38 = vld [vmem:[#allocation2 + $0x78] sm:$0xff]
    %v39 = vand.u32 2147483647, %v23
    %v40 = vand.u32 2147483647, %v24
    %v41 = vand.u32 2147483647, %v25
    %v42 = vand.u32 2147483647, %v26
    %v43 = vand.u32 2147483647, %v27
    %v44 = vand.u32 2147483647, %v28
    %v45 = vand.u32 2147483647, %v29
    %v46 = vand.u32 2147483647, %v30
    %v47 = vand.u32 2147483647, %v31
    %v48 = vand.u32 2147483647, %v32
    %v49 = vand.u32 2147483647, %v33
    %v50 = vand.u32 2147483647, %v34
    %v51 = vand.u32 2147483647, %v35
    %v52 = vand.u32 2147483647, %v36
    %v53 = vand.u32 2147483647, %v37
    %v54 = vand.u32 2147483647, %v38
    %55 = vmax.xlane.f32.xlu0 %v39
    %v56 = vpop.xlane.xlu0 %55
    %57 = vmax.xlane.f32.xlu0 %v40
    %v58 = vpop.xlane.xlu0 %57
    %59 = vmax.xlane.f32.xlu0 %v41
    %v60 = vpop.xlane.xlu0 %59
    %61 = vmax.xlane.f32.xlu0 %v42
    %v62 = vpop.xlane.xlu0 %61
    %63 = vmax.xlane.f32.xlu0 %v43
    %v64 = vpop.xlane.xlu0 %63
    %65 = vmax.xlane.f32.xlu0 %v44
    %v66 = vpop.xlane.xlu0 %65
    %67 = vmax.xlane.f32.xlu0 %v45
    %v68 = vpop.xlane.xlu0 %67
    %69 = vmax.xlane.f32.xlu0 %v46
    %v70 = vpop.xlane.xlu0 %69
    %71 = vmax.xlane.f32.xlu0 %v47
    %v72 = vpop.xlane.xlu0 %71
    %73 = vmax.xlane.f32.xlu0 %v48
    %v74 = vpop.xlane.xlu0 %73
    %75 = vmax.xlane.f32.xlu0 %v49
    %v76 = vpop.xlane.xlu0 %75
    %77 = vmax.xlane.f32.xlu0 %v50
    %v78 = vpop.xlane.xlu0 %77
    %79 = vmax.xlane.f32.xlu0 %v51
    %v80 = vpop.xlane.xlu0 %79
    %81 = vmax.xlane.f32.xlu0 %v52
    %v82 = vpop.xlane.xlu0 %81
    %83 = vmax.xlane.f32.xlu0 %v53
    %v84 = vpop.xlane.xlu0 %83
    %85 = vmax.xlane.f32.xlu0 %v54
    %v86 = vpop.xlane.xlu0 %85
    %vm87 = vcmp.eq.f32.partialorder %v56, 0.0
    %vm88 = vcmp.eq.f32.partialorder %v58, 0.0
    %vm89 = vcmp.eq.f32.partialorder %v60, 0.0
    %vm90 = vcmp.eq.f32.partialorder %v62, 0.0
    %vm91 = vcmp.eq.f32.partialorder %v64, 0.0
    %vm92 = vcmp.eq.f32.partialorder %v66, 0.0
    %vm93 = vcmp.eq.f32.partialorder %v68, 0.0
    %vm94 = vcmp.eq.f32.partialorder %v70, 0.0
    %vm95 = vcmp.eq.f32.partialorder %v72, 0.0
    %vm96 = vcmp.eq.f32.partialorder %v74, 0.0
    %vm97 = vcmp.eq.f32.partialorder %v76, 0.0
    %vm98 = vcmp.eq.f32.partialorder %v78, 0.0
    %vm99 = vcmp.eq.f32.partialorder %v80, 0.0
    %vm100 = vcmp.eq.f32.partialorder %v82, 0.0
    %vm101 = vcmp.eq.f32.partialorder %v84, 0.0
    %vm102 = vcmp.eq.f32.partialorder %v86, 0.0
    %v103 = vsel %vm87, 1.0, %v56
    %v104 = vsel %vm88, 1.0, %v58
    %v105 = vsel %vm89, 1.0, %v60
    %v106 = vsel %vm90, 1.0, %v62
    %v107 = vsel %vm91, 1.0, %v64
    %v108 = vsel %vm92, 1.0, %v66
    %v109 = vsel %vm93, 1.0, %v68
    %v110 = vsel %vm94, 1.0, %v70
    %v111 = vsel %vm95, 1.0, %v72
    %v112 = vsel %vm96, 1.0, %v74
    %v113 = vsel %vm97, 1.0, %v76
    %v114 = vsel %vm98, 1.0, %v78
    %v115 = vsel %vm99, 1.0, %v80
    %v116 = vsel %vm100, 1.0, %v82
    %v117 = vsel %vm101, 1.0, %v84
    %v118 = vsel %vm102, 1.0, %v86
    %v119 = vrcp.pop 127.0
    %v120 = vmul.f32 %v103, %v119
    %v121 = vmul.f32 %v104, %v119
    %v122 = vmul.f32 %v105, %v119
    %v123 = vmul.f32 %v106, %v119
    %v124 = vmul.f32 %v107, %v119
    %v125 = vmul.f32 %v108, %v119
    %v126 = vmul.f32 %v109, %v119
    %v127 = vmul.f32 %v110, %v119
    %v128 = vmul.f32 %v111, %v119
    %v129 = vmul.f32 %v112, %v119
    %v130 = vmul.f32 %v113, %v119
    %v131 = vmul.f32 %v114, %v119
    %v132 = vmul.f32 %v115, %v119
    %v133 = vmul.f32 %v116, %v119
    %v134 = vmul.f32 %v117, %v119
    %v135 = vmul.f32 %v118, %v119
    %v136 = vrcp.pop %v120
    %v137 = vmul.f32 %v23, %v136
    %v138 = vrcp.pop %v121
    %v139 = vmul.f32 %v24, %v138
    %v140 = vrcp.pop %v122
    %v141 = vmul.f32 %v25, %v140
    %v142 = vrcp.pop %v123
    %v143 = vmul.f32 %v26, %v142
    %v144 = vrcp.pop %v124
    %v145 = vmul.f32 %v27, %v144
    %v146 = vrcp.pop %v125
    %v147 = vmul.f32 %v28, %v146
    %v148 = vrcp.pop %v126
    %v149 = vmul.f32 %v29, %v148
    %v150 = vrcp.pop %v127
    %v151 = vmul.f32 %v30, %v150
    %v152 = vrcp.pop %v128
    %v153 = vmul.f32 %v31, %v152
    %v154 = vrcp.pop %v129
    %v155 = vmul.f32 %v32, %v154
    %v156 = vrcp.pop %v130
    %v157 = vmul.f32 %v33, %v156
    %v158 = vrcp.pop %v131
    %v159 = vmul.f32 %v34, %v158
    %v160 = vrcp.pop %v132
    %v161 = vmul.f32 %v35, %v160
    %v162 = vrcp.pop %v133
    %v163 = vmul.f32 %v36, %v162
    %v164 = vrcp.pop %v134
    %v165 = vmul.f32 %v37, %v164
    %v166 = vrcp.pop %v135
    %v167 = vmul.f32 %v38, %v166
    %v168 = vround.ne.pseudo %v137
    %v169 = vround.ne.pseudo %v139
    %v170 = vround.ne.pseudo %v141
    %v171 = vround.ne.pseudo %v143
    %v172 = vround.ne.pseudo %v145
    %v173 = vround.ne.pseudo %v147
    %v174 = vround.ne.pseudo %v149
    %v175 = vround.ne.pseudo %v151
    %v176 = vround.ne.pseudo %v153
    %v177 = vround.ne.pseudo %v155
    %v178 = vround.ne.pseudo %v157
    %v179 = vround.ne.pseudo %v159
    %v180 = vround.ne.pseudo %v161
    %v181 = vround.ne.pseudo %v163
    %v182 = vround.ne.pseudo %v165
    %v183 = vround.ne.pseudo %v167
    %v184 = vmax.f32 %v168, -128.0
    %v185 = vmax.f32 %v169, -128.0
    %v186 = vmax.f32 %v170, -128.0
    %v187 = vmax.f32 %v171, -128.0
    %v188 = vmax.f32 %v172, -128.0
    %v189 = vmax.f32 %v173, -128.0
    %v190 = vmax.f32 %v174, -128.0
    %v191 = vmax.f32 %v175, -128.0
    %v192 = vmax.f32 %v176, -128.0
    %v193 = vmax.f32 %v177, -128.0
    %v194 = vmax.f32 %v178, -128.0
    %v195 = vmax.f32 %v179, -128.0
    %v196 = vmax.f32 %v180, -128.0
    %v197 = vmax.f32 %v181, -128.0
    %v198 = vmax.f32 %v182, -128.0
    %v199 = vmax.f32 %v183, -128.0
    %v200 = vmin.f32 %v184, 127.0
    %v201 = vmin.f32 %v185, 127.0
    %v202 = vmin.f32 %v186, 127.0
    %v203 = vmin.f32 %v187, 127.0
    %v204 = vmin.f32 %v188, 127.0
    %v205 = vmin.f32 %v189, 127.0
    %v206 = vmin.f32 %v190, 127.0
    %v207 = vmin.f32 %v191, 127.0
    %v208 = vmin.f32 %v192, 127.0
    %v209 = vmin.f32 %v193, 127.0
    %v210 = vmin.f32 %v194, 127.0
    %v211 = vmin.f32 %v195, 127.0
    %v212 = vmin.f32 %v196, 127.0
    %v213 = vmin.f32 %v197, 127.0
    %v214 = vmin.f32 %v198, 127.0
    %v215 = vmin.f32 %v199, 127.0
    %v216 = vmul.f32 %v200, %v120
    %v217 = vmul.f32 %v201, %v121
    %v218 = vmul.f32 %v202, %v122
    %v219 = vmul.f32 %v203, %v123
    %v220 = vmul.f32 %v204, %v124
    %v221 = vmul.f32 %v205, %v125
    %v222 = vmul.f32 %v206, %v126
    %v223 = vmul.f32 %v207, %v127
    %v224 = vmul.f32 %v208, %v128
    %v225 = vmul.f32 %v209, %v129
    %v226 = vmul.f32 %v210, %v130
    %v227 = vmul.f32 %v211, %v131
    %v228 = vmul.f32 %v212, %v132
    %v229 = vmul.f32 %v213, %v133
    %v230 = vmul.f32 %v214, %v134
    %v231 = vmul.f32 %v215, %v135
    %232 = vxpose.xlu0.b32.start [1/16] %v216, 128
    %233 = vxpose.xlu0.b32.cont [2/16] %v217, 128
    %234 = vxpose.xlu0.b32.cont [3/16] %v218, 128
    %235 = vxpose.xlu0.b32.cont [4/16] %v219, 128
    %236 = vxpose.xlu0.b32.cont [5/16] %v220, 128
    %237 = vxpose.xlu0.b32.cont [6/16] %v221, 128
    %238 = vxpose.xlu0.b32.cont [7/16] %v222, 128
    %239 = vxpose.xlu0.b32.cont [8/16] %v223, 128
    %240 = vxpose.xlu0.b32.cont [9/16] %v224, 128
    %241 = vxpose.xlu0.b32.cont [10/16] %v225, 128
    %242 = vxpose.xlu0.b32.cont [11/16] %v226, 128
    %243 = vxpose.xlu0.b32.cont [12/16] %v227, 128
    %244 = vxpose.xlu0.b32.cont [13/16] %v228, 128
    %245 = vxpose.xlu0.b32.cont [14/16] %v229, 128
    %246 = vxpose.xlu0.b32.cont [15/16] %v230, 128
    %247 = vxpose.xlu0.b32.end [16/16] %v231, 128
    %v248 = vpop.trf.xlu0
    %v249 = vpop.trf.xlu0
    %v250 = vpop.trf.xlu0
    %v251 = vpop.trf.xlu0
    %v252 = vpop.trf.xlu0
    %v253 = vpop.trf.xlu0
    %v254 = vpop.trf.xlu0
    %v255 = vpop.trf.xlu0
    %v256 = vpop.trf.xlu0
    %v257 = vpop.trf.xlu0
    %v258 = vpop.trf.xlu0
    %v259 = vpop.trf.xlu0
    %v260 = vpop.trf.xlu0
    %v261 = vpop.trf.xlu0
    %v262 = vpop.trf.xlu0
    %v263 = vpop.trf.xlu0
    %264 = vst [vmem:[#allocation5] sm:$0xff] %v248
    %265 = vst [vmem:[#allocation5 + $0x8] sm:$0xff] %v249
    %266 = vst [vmem:[#allocation5 + $0x10] sm:$0xff] %v250
    %267 = vst [vmem:[#allocation5 + $0x18] sm:$0xff] %v251
    %268 = vst [vmem:[#allocation5 + $0x20] sm:$0xff] %v252
    %269 = vst [vmem:[#allocation5 + $0x28] sm:$0xff] %v253
    %270 = vst [vmem:[#allocation5 + $0x30] sm:$0xff] %v254
    %271 = vst [vmem:[#allocation5 + $0x38] sm:$0xff] %v255
    %272 = vst [vmem:[#allocation5 + $0x40] sm:$0xff] %v256
    %273 = vst [vmem:[#allocation5 + $0x48] sm:$0xff] %v257
    %274 = vst [vmem:[#allocation5 + $0x50] sm:$0xff] %v258
    %275 = vst [vmem:[#allocation5 + $0x58] sm:$0xff] %v259
    %276 = vst [vmem:[#allocation5 + $0x60] sm:$0xff] %v260
    %277 = vst [vmem:[#allocation5 + $0x68] sm:$0xff] %v261
    %278 = vst [vmem:[#allocation5 + $0x70] sm:$0xff] %v262
    %279 = vst [vmem:[#allocation5 + $0x78] sm:$0xff] %v263
    // Predicated region
    $region10: #{tpu_custom_call.1} parent=1 // pred_check
      _
    $region11: #{tpu_custom_call.1} parent=1 // pred_check_branch
      %281 = sbr.rel (0) target = $region13
    $region12: #{tpu_custom_call.1} parent=1 // pred_region
      %s283 = ssub.s32 2048, 2048
      %284 = vsyncadd [#allocation4], %s283
      %s285 = sshll.u32 [#allocation5], 4
      %s286 = int_to_ptr.vmem [resolvable:$true] %s285
      %291 = dma.vmem_to_hbm [thread:$0]  %s286, 2048, %s1, [#allocation4], 128, 128, 8
    $region13: #{tpu_custom_call.1} parent=1 // pred_fallthru
      _
    // Predicated region
    $region14: #{tpu_custom_call.1} parent=1 // pred_check
      _
    $region15: #{tpu_custom_call.1} parent=1 // pred_check_branch
      %293 = sbr.rel (0) target = $region17
    $region16: #{tpu_custom_call.1} parent=1 // pred_region
      %294 = dma.done [#allocation4], 2048
    $region17: #{tpu_custom_call.1} parent=1 // pred_fallthru
      _
    %295 = vsyncpa [#allocation3], 1
    %296 = vsyncpa [#allocation4], 1

</llo_original>
